<compile_context>
chip_gen: v5e
topology: v5e:2x2
jax: 0.10.0
libtpu: 0.0.40
codegen_flags: <defaults>
</compile_context>

<pallas_src>
import functools

import jax
import jax.numpy as jnp
from jax.experimental import pallas as pl
from jax.experimental.pallas import tpu as pltpu

ALPHA = 1.0
GAMMA = 2.0          # gamma == 2 -> (1 - pt)**2 implemented as a single multiply
LANES = 128
SUBLANES = 8


def _focal_elementwise(x, t, binary_targets):
    """Per-element focal loss in f32. Shared by the kernel and the epilogue's
    pad-correction so padded elements cancel (to f32 rounding) exactly."""
    e = jnp.exp(-jnp.abs(x))
    bce = jnp.maximum(x, 0.0) - x * t + jnp.log1p(e)
    if binary_targets:
        # For t in {0,1}: exp(-bce) == numer / (1 + e); saves one exp/element.
        numer = jnp.where(t > 0.5,
                          jnp.where(x >= 0.0, 1.0, e),
                          jnp.where(x >= 0.0, e, 1.0))
        pt = numer / (1.0 + e)
    else:
        pt = jnp.exp(-bce)
    one_minus_pt = 1.0 - pt
    return (ALPHA * one_minus_pt * one_minus_pt) * bce


def _focal_loss_kernel(x_ref, t_ref, out_ref, acc_ref, *, binary_targets):
    i = pl.program_id(1)              # row-block within this core split

    @pl.when(i == 0)
    def _():
        acc_ref[...] = jnp.zeros_like(acc_ref)

    x = x_ref[...].astype(jnp.float32)
    t = t_ref[...].astype(jnp.float32)
    focal = _focal_elementwise(x, t, binary_targets)

    # Per-(sublane,lane) partial sums: pure VPU adds over groups of 8 rows.
    # Cross-lane reduction is deferred to the tiny wrapper-side epilogue.
    row_tile = focal.shape[0]
    acc_ref[...] += jnp.sum(
        focal.reshape(row_tile // SUBLANES, SUBLANES, LANES), axis=0)

    @pl.when(i == pl.num_programs(1) - 1)
    def _():
        out_ref[...] = acc_ref[...]


def focal_loss(inputs, targets, *, row_tile_target=4096, num_splits=2,
               binary_targets=False):
    """Mean focal loss over all elements of `inputs`/`targets` (same shape)."""
    assert inputs.shape == targets.shape
    n = int(inputs.size)

    x = jnp.ravel(inputs)
    t = jnp.ravel(targets)

    # Lane-dense [rows, 128] slab with rows % 8 == 0. For n % 1024 == 0 (the
    # common case) this is a free reshape of the contiguous buffer.
    tail_pad = (-n) % (SUBLANES * LANES)
    if tail_pad:
        x = jnp.pad(x, (0, tail_pad))
        t = jnp.pad(t, (0, tail_pad))
    rows = (n + tail_pad) // LANES                 # multiple of 8
    x2 = x.reshape(rows, LANES)
    t2 = t.reshape(rows, LANES)

    # Tiling: large blocks (default 4096 rows == 2 MiB f32 per input block;
    # 2 inputs x 2 buffers = 8 MiB) amortize per-grid-step overhead and fit
    # every chip's scoped-VMEM budget. Then rebalance evenly over the grid so
    # it is exact: no in-kernel mask, no clamped duplicate block.
    row_tile_target = max(SUBLANES, (row_tile_target // SUBLANES) * SUBLANES)
    row_tile = min(row_tile_target, rows)
    nblocks = pl.cdiv(rows, row_tile)
    splits = num_splits if nblocks >= num_splits else 1
    bpc = pl.cdiv(nblocks, splits)                 # row-blocks per core split
    nblocks_total = splits * bpc
    row_tile = pl.cdiv(pl.cdiv(rows, nblocks_total), SUBLANES) * SUBLANES
    total_rows = nblocks_total * row_tile
    if total_rows > rows:
        x2 = jnp.pad(x2, ((0, total_rows - rows), (0, 0)))
        t2 = jnp.pad(t2, ((0, total_rows - rows), (0, 0)))

    in_spec = pl.BlockSpec((row_tile, LANES), lambda c, i: (c * bpc + i, 0))
    out_spec = pl.BlockSpec((SUBLANES, LANES), lambda c, i: (c, 0))

    kernel = functools.partial(_focal_loss_kernel, binary_targets=binary_targets)

    partials = pl.pallas_call(
        kernel,
        out_shape=jax.ShapeDtypeStruct((splits * SUBLANES, LANES), jnp.float32),
        grid_spec=pltpu.PrefetchScalarGridSpec(
            num_scalar_prefetch=0,
            grid=(splits, bpc),
            in_specs=[in_spec, in_spec],
            out_specs=out_spec,
            scratch_shapes=[pltpu.VMEM((SUBLANES, LANES), jnp.float32)],
        ),
        compiler_params=pltpu.CompilerParams(
            dimension_semantics=("parallel", "arbitrary"),
            vmem_limit_bytes=32 << 20),
    )(x2, t2)

    # Epilogue: cross-lane reduce of (splits*8, 128) partials, subtract the
    # exact contribution of the zero-padded elements (focal(0,0) != 0), scale
    # by 1/n for the mean.
    total = jnp.sum(partials)
    pad_count = total_rows * LANES - n
    if pad_count:
        total = total - pad_count * _focal_elementwise(
            jnp.float32(0.0), jnp.float32(0.0), binary_targets)
    return total / n


def focal_loss_ref(inputs, targets):
    x = inputs.astype(jnp.float32)
    t = targets.astype(jnp.float32)
    bce = jnp.maximum(x, 0.0) - x * t + jnp.log1p(jnp.exp(-jnp.abs(x)))
    pt = jnp.exp(-bce)
    return jnp.mean(ALPHA * (1.0 - pt) ** GAMMA * bce)


if __name__ == "__main__":
    key = jax.random.PRNGKey(0)
    k1, k2, k3, k4 = jax.random.split(key, 4)

    # NCHW-shaped logits and binary targets, as FocalLoss would receive.
    logits = jax.random.normal(k1, (2, 4, 16, 16), dtype=jnp.float32)
    targets = (jax.random.uniform(k2, (2, 4, 16, 16)) > 0.5).astype(jnp.float32)

    out = focal_loss(logits, targets)
    jax.block_until_ready(out)
    ref = focal_loss_ref(logits, targets)
    assert jnp.allclose(out, ref, rtol=1e-5, atol=1e-6), (out, ref)

    # Binary-target fast path (one fewer transcendental per element).
    out_bin = focal_loss(logits, targets, binary_targets=True)
    jax.block_until_ready(out_bin)
    assert jnp.allclose(out_bin, ref, rtol=1e-5, atol=1e-6), (out_bin, ref)

    # Odd, non-1024-aligned size exercising wrapper padding + pad correction.
    logits2 = jax.random.normal(k3, (3, 5, 17, 19), dtype=jnp.float32)
    targets2 = (jax.random.uniform(k4, (3, 5, 17, 19)) > 0.5).astype(jnp.float32)
    out2 = focal_loss(logits2, targets2)
    jax.block_until_ready(out2)
    ref2 = focal_loss_ref(logits2, targets2)
    assert jnp.allclose(out2, ref2, rtol=1e-5, atol=1e-6), (out2, ref2)

    print("KERNEL_OK")
</pallas_src>

<mosaic_0001>
module attributes {stable_mosaic.version = 11 : i64} {
  func.func @_focal_loss_kernel(%arg0: i32, %arg1: i32, %arg2: memref<16x128xf32, #tpu.memory_space<vmem>>, %arg3: memref<16x128xf32, #tpu.memory_space<vmem>>, %arg4: memref<8x128xf32, #tpu.memory_space<vmem>>, %arg5: memref<8x128xf32, #tpu.memory_space<vmem>>) attributes {dimension_semantics = [#tpu.dimension_semantics<parallel>, #tpu.dimension_semantics<arbitrary>], iteration_bounds = array<i64: 1, 1>, scalar_prefetch = 0 : i64, scratch_operands = 1 : i64, tpu.core_type = #tpu.core_type<tc>, window_params = [{transform_indices = @transform_0, window_bounds = array<i64: 16, 128>}, {transform_indices = @transform_1, window_bounds = array<i64: 16, 128>}, {transform_indices = @transform_2, window_bounds = array<i64: 8, 128>}]} {
    %c0_i32 = arith.constant 0 : i32
    %0 = arith.cmpi eq, %arg1, %c0_i32 : i32
    %1 = arith.extui %0 : i1 to i32
    %c0_i32_0 = arith.constant 0 : i32
    %2 = arith.cmpi ne, %1, %c0_i32_0 : i32
    scf.if %2 {
      %cst_15 = arith.constant 0.000000e+00 : f32
      %32 = vector.broadcast %cst_15 : f32 to vector<8x128xf32>
      %c0_16 = arith.constant 0 : index
      %c0_17 = arith.constant 0 : index
      %33 = vector.load %arg5[%c0_16, %c0_17] : memref<8x128xf32, #tpu.memory_space<vmem>>, vector<8x128xf32>
      tpu.vector_store %arg5[%c0_16, %c0_17], %32 {strides = array<i32>} : memref<8x128xf32, #tpu.memory_space<vmem>>, vector<8x128xf32>,
    } else {
    }
    %c0 = arith.constant 0 : index
    %c0_1 = arith.constant 0 : index
    %3 = vector.load %arg2[%c0, %c0_1] : memref<16x128xf32, #tpu.memory_space<vmem>>, vector<16x128xf32>
    %c0_2 = arith.constant 0 : index
    %c0_3 = arith.constant 0 : index
    %4 = vector.load %arg3[%c0_2, %c0_3] : memref<16x128xf32, #tpu.memory_space<vmem>>, vector<16x128xf32>
    %5 = math.absf %3 : vector<16x128xf32>
    %cst = arith.constant 0.000000e+00 : f32
    %6 = vector.broadcast %cst : f32 to vector<16x128xf32>
    %7 = arith.subf %6, %5 : vector<16x128xf32>
    %8 = math.exp %7 : vector<16x128xf32>
    %cst_4 = arith.constant 0.000000e+00 : f32
    %9 = vector.broadcast %cst_4 : f32 to vector<16x128xf32>
    %10 = arith.maximumf %3, %9 : vector<16x128xf32>
    %11 = arith.mulf %3, %4 : vector<16x128xf32>
    %12 = arith.subf %10, %11 : vector<16x128xf32>
    %13 = math.log1p %8 : vector<16x128xf32>
    %14 = arith.addf %12, %13 : vector<16x128xf32>
    %cst_5 = arith.constant 0.000000e+00 : f32
    %15 = vector.broadcast %cst_5 : f32 to vector<16x128xf32>
    %16 = arith.subf %15, %14 : vector<16x128xf32>
    %17 = math.exp %16 : vector<16x128xf32>
    %cst_6 = arith.constant 1.000000e+00 : f32
    %18 = vector.broadcast %cst_6 : f32 to vector<16x128xf32>
    %19 = arith.subf %18, %17 : vector<16x128xf32>
    %cst_7 = arith.constant 1.000000e+00 : f32
    %20 = vector.broadcast %cst_7 : f32 to vector<16x128xf32>
    %21 = arith.mulf %20, %19 : vector<16x128xf32>
    %22 = arith.mulf %21, %19 : vector<16x128xf32>
    %23 = arith.mulf %22, %14 : vector<16x128xf32>
    %c0_8 = arith.constant 0 : index
    %c0_9 = arith.constant 0 : index
    %24 = vector.load %arg5[%c0_8, %c0_9] : memref<8x128xf32, #tpu.memory_space<vmem>>, vector<8x128xf32>
    %25 = vector.shape_cast %23 : vector<16x128xf32> to vector<2x8x128xf32>
    %cst_10 = arith.constant dense<0.000000e+00> : vector<8x128xf32>
    %26 = vector.multi_reduction <add>, %25, %cst_10 [0] : vector<2x8x128xf32> to vector<8x128xf32>
    %27 = arith.addf %24, %26 : vector<8x128xf32>
    %c0_11 = arith.constant 0 : index
    %c0_12 = arith.constant 0 : index
    %28 = vector.load %arg5[%c0_11, %c0_12] : memref<8x128xf32, #tpu.memory_space<vmem>>, vector<8x128xf32>
    tpu.vector_store %arg5[%c0_11, %c0_12], %27 {strides = array<i32>} : memref<8x128xf32, #tpu.memory_space<vmem>>, vector<8x128xf32>,
    %c0_i32_13 = arith.constant 0 : i32
    %29 = arith.cmpi eq, %arg1, %c0_i32_13 : i32
    %30 = arith.extui %29 : i1 to i32
    %c0_i32_14 = arith.constant 0 : i32
    %31 = arith.cmpi ne, %30, %c0_i32_14 : i32
    scf.if %31 {
      %c0_15 = arith.constant 0 : index
      %c0_16 = arith.constant 0 : index
      %32 = vector.load %arg5[%c0_15, %c0_16] : memref<8x128xf32, #tpu.memory_space<vmem>>, vector<8x128xf32>
      %c0_17 = arith.constant 0 : index
      %c0_18 = arith.constant 0 : index
      %33 = vector.load %arg4[%c0_17, %c0_18] : memref<8x128xf32, #tpu.memory_space<vmem>>, vector<8x128xf32>
      tpu.vector_store %arg4[%c0_17, %c0_18], %32 {strides = array<i32>} : memref<8x128xf32, #tpu.memory_space<vmem>>, vector<8x128xf32>,
    } else {
    }
    return
  }
  func.func @transform_0(%arg0: i32, %arg1: i32) -> (i32, i32) {
    %c1_i32 = arith.constant 1 : i32
    %0 = arith.muli %arg0, %c1_i32 : i32
    %1 = arith.addi %0, %arg1 : i32
    %c0_i32 = arith.constant 0 : i32
    %c0_i32_0 = arith.constant 0 : i32
    return %1, %c0_i32 : i32, i32
  }
  func.func @transform_1(%arg0: i32, %arg1: i32) -> (i32, i32) {
    %c1_i32 = arith.constant 1 : i32
    %0 = arith.muli %arg0, %c1_i32 : i32
    %1 = arith.addi %0, %arg1 : i32
    %c0_i32 = arith.constant 0 : i32
    %c0_i32_0 = arith.constant 0 : i32
    return %1, %c0_i32 : i32, i32
  }
  func.func @transform_2(%arg0: i32, %arg1: i32) -> (i32, i32) {
    %c0_i32 = arith.constant 0 : i32
    %c0_i32_0 = arith.constant 0 : i32
    return %arg0, %c0_i32 : i32, i32
  }
}

</mosaic_0001>

<llo_original>
// kernel: tpu_custom_call.1
$region0: #{tpu_custom_call.1}
  #allocation0 [shape = 'u32[]', space=smem, size = 0x4, offset = 0x4, fixed_abs, tag = 'smem constant byte address 0x4 - core index']
  #allocation1 [shape = 'u32[72,128]{1,0:T(1,128)}', space=vmem, size = 0x9000, scoped, tag = 'internal scratch']
  #allocation2 [shape = 'f32[8,128]{1,0:T(8,128)}', space=vmem, size = 0x1000, scoped, tag = 'scratch operand']
  %s0 = inlined_call_operand.hbm [shape: f32[16,128], index: 0, kind: input, shape index: {}]
  %s1 = inlined_call_operand.hbm [shape: f32[16,128], index: 1, kind: input, shape index: {}]
  %s2 = inlined_call_operand.hbm [shape: f32[8,128], index: 2, kind: output, shape index: {}]
  %s3 = sld [smem:[#allocation0]]
  $region34: #{tpu_custom_call.1} parent=0
    _
  %s5 = ssub.s32 1, %s3
  %s6 = scalar_select 0, %s5, %s3
  $region1: #{tpu_custom_call.1} parent=0
    #allocation3 [shape = 'u8[8192]{0}', space=vmem, size = 0x2000, scoped, tag = 'input window, operand 0, single buffered']
    #allocation4 [shape = 's32[1]{0}', space=sflag, size = 0x4, scoped, tag = 'scoped memory for tpu_custom_call.1']
    #allocation5 [shape = 's32[1]{0}', space=sflag, size = 0x4, scoped, tag = 'scoped memory for tpu_custom_call.1']
    #allocation6 [shape = 'u8[8192]{0}', space=vmem, size = 0x2000, scoped, tag = 'input window, operand 1, single buffered']
    #allocation7 [shape = 's32[1]{0}', space=sflag, size = 0x4, scoped, tag = 'scoped memory for tpu_custom_call.1']
    #allocation8 [shape = 'u8[4096]{0}', space=vmem, size = 0x1000, scoped, tag = 'output window, operand 0, single buffered']
    %7 = vsyncpa [#allocation4], 0
    %8 = vsyncpa [#allocation7], 0
    %9 = vsyncpa [#allocation5], 0
    // Predicated region
    $region2: #{tpu_custom_call.1} parent=1 // pred_check
      _
    $region3: #{tpu_custom_call.1} parent=1 // pred_check_branch
      %11 = sbr.rel (0) target = $region5
    $region4: #{tpu_custom_call.1} parent=1 // pred_region
      %s12 = sadd.s32 0, 0
      %s13 = smul.u32 2, %s12
      %15 = vsyncadd [#allocation4], 0
      %s16 = smul.addr %s13, 8
      %s17 = scalar_lea.hbm %s0, %s16
      %s18 = sshll.u32 %s17, 4
      %s19 = int_to_ptr.hbm [resolvable:$true] %s18
      %s20 = sshll.u32 [#allocation3], 4
      %s21 = int_to_ptr.vmem [resolvable:$true] %s20
      %26 = dma.hbm_to_vmem [thread:$0]  %s19, 256, %s21, [#allocation4], 128, 128, 8
    $region5: #{tpu_custom_call.1} parent=1 // pred_fallthru
      _
    // Predicated region
    $region6: #{tpu_custom_call.1} parent=1 // pred_check
      _
    $region7: #{tpu_custom_call.1} parent=1 // pred_check_branch
      %28 = sbr.rel (0) target = $region9
    $region8: #{tpu_custom_call.1} parent=1 // pred_region
      %s29 = sadd.s32 0, 0
      %s30 = smul.u32 2, %s29
      %32 = vsyncadd [#allocation7], 0
      %s33 = smul.addr %s30, 8
      %s34 = scalar_lea.hbm %s1, %s33
      %s35 = sshll.u32 %s34, 4
      %s36 = int_to_ptr.hbm [resolvable:$true] %s35
      %s37 = sshll.u32 [#allocation6], 4
      %s38 = int_to_ptr.vmem [resolvable:$true] %s37
      %43 = dma.hbm_to_vmem [thread:$0]  %s36, 256, %s38, [#allocation7], 128, 128, 8
    $region9: #{tpu_custom_call.1} parent=1 // pred_fallthru
      _
    // Predicated region
    $region10: #{tpu_custom_call.1} parent=1 // pred_check
      _
    $region11: #{tpu_custom_call.1} parent=1 // pred_check_branch
      %45 = sbr.rel (0) target = $region13
    $region12: #{tpu_custom_call.1} parent=1 // pred_region
      %47 = dma.done [#allocation4], 256
    $region13: #{tpu_custom_call.1} parent=1 // pred_fallthru
      _
    // Predicated region
    $region14: #{tpu_custom_call.1} parent=1 // pred_check
      _
    $region15: #{tpu_custom_call.1} parent=1 // pred_check_branch
      %49 = sbr.rel (0) target = $region17
    $region16: #{tpu_custom_call.1} parent=1 // pred_region
      %51 = dma.done [#allocation7], 256
    $region17: #{tpu_custom_call.1} parent=1 // pred_fallthru
      _
    %s52 = sadd.s32 0, 0
    %s53 = smul.u32 2, %s52
    %s54 = sadd.s32 0, 0
    %s55 = smul.u32 2, %s54
    %p56 = scmp.eq.s32.totalorder 0, 0
    // Predicated region
    $region18: #{tpu_custom_call.1} parent=1 // pred_check
      %p57 = pneg %p56
    $region19: #{tpu_custom_call.1} parent=1 // pred_check_branch
      %59 = sbr.rel (%p57) target = $region21
    $region20: #{tpu_custom_call.1} parent=1 // pred_region
      %60 = vst [vmem:[#allocation2] sm:$0xff] 0.0
    $region21: #{tpu_custom_call.1} parent=1 // pred_fallthru
      _
    %v61 = vld [vmem:[#allocation3] sm:$0xff]
    %v62 = vld [vmem:[#allocation3 + $0x8] sm:$0xff]
    %v63 = vld [vmem:[#allocation6] sm:$0xff]
    %v64 = vld [vmem:[#allocation6 + $0x8] sm:$0xff]
    %v65 = vand.u32 2147483647, %v61
    %v66 = vand.u32 2147483647, %v62
    %v67 = vsub.f32 0.0, %v65
    %v68 = vsub.f32 0.0, %v66
    %v69 = vmul.f32 %v67, 1.442695
    %v70 = vpow.pop %v69
    %v71 = vmul.f32 %v68, 1.442695
    %v72 = vpow.pop %v71
    %v73 = vmax.f32 %v61, 0.0
    %v74 = vmax.f32 %v62, 0.0
    %v75 = vmul.f32 %v61, %v63
    %v76 = vmul.f32 %v62, %v64
    %v77 = vsub.f32 %v73, %v75
    %v78 = vsub.f32 %v74, %v76
    %v79 = vadd.f32 %v70, 1.0
    %v80 = vlog2.pop %v79
    %v81 = vmul.f32 %v80, 0.6931472
    %v82 = vmul.f32 -0.5, %v70
    %v83 = vadd.f32 %v82, 1.0
    %v84 = vmul.f32 %v83, %v70
    %v85 = vand.u32 2147483647, %v70
    %vm86 = vcmp.lt.f32.partialorder %v85, 0.0004427343
    %v87 = vsel %vm86, %v84, %v81
    %v88 = vadd.f32 %v72, 1.0
    %v89 = vlog2.pop %v88
    %v90 = vmul.f32 %v89, 0.6931472
    %v91 = vmul.f32 -0.5, %v72
    %v92 = vadd.f32 %v91, 1.0
    %v93 = vmul.f32 %v92, %v72
    %v94 = vand.u32 2147483647, %v72
    %vm95 = vcmp.lt.f32.partialorder %v94, 0.0004427343
    %v96 = vsel %vm95, %v93, %v90
    %v97 = vadd.f32 %v77, %v87
    %v98 = vadd.f32 %v78, %v96
    %v99 = vsub.f32 0.0, %v97
    %v100 = vsub.f32 0.0, %v98
    %v101 = vmul.f32 %v99, 1.442695
    %v102 = vpow.pop %v101
    %v103 = vmul.f32 %v100, 1.442695
    %v104 = vpow.pop %v103
    %v105 = vsub.f32 1.0, %v102
    %v106 = vsub.f32 1.0, %v104
    %v107 = vmul.f32 %v105, %v105
    %v108 = vmul.f32 %v106, %v106
    %v109 = vmul.f32 %v107, %v97
    %v110 = vmul.f32 %v108, %v98
    %v111 = vld [vmem:[#allocation2] sm:$0xff]
    %v112 = vadd.f32 %v109, %v110
    %v113 = vadd.f32 %v111, %v112
    %114 = vst [vmem:[#allocation2] sm:$0xff] %v113
    // Predicated region
    $region22: #{tpu_custom_call.1} parent=1 // pred_check
      %p115 = pneg %p56
    $region23: #{tpu_custom_call.1} parent=1 // pred_check_branch
      %117 = sbr.rel (%p115) target = $region25
    $region24: #{tpu_custom_call.1} parent=1 // pred_region
      %v118 = vld [vmem:[#allocation2] sm:$0xff]
      %119 = vst [vmem:[#allocation8] sm:$0xff] %v118
    $region25: #{tpu_custom_call.1} parent=1 // pred_fallthru
      _
    // Predicated region
    $region26: #{tpu_custom_call.1} parent=1 // pred_check
      _
    $region27: #{tpu_custom_call.1} parent=1 // pred_check_branch
      %121 = sbr.rel (0) target = $region29
    $region28: #{tpu_custom_call.1} parent=1 // pred_region
      %123 = vsyncadd [#allocation5], 0
      %s125 = sshll.u32 [#allocation8], 4
      %s126 = int_to_ptr.vmem [resolvable:$true] %s125
      %s127 = sshll.u32 %s2, 4
      %s128 = int_to_ptr.hbm [resolvable:$true] %s127
      %130 = dma.vmem_to_hbm [thread:$0]  %s126, 128, %s128, [#allocation5]
    $region29: #{tpu_custom_call.1} parent=1 // pred_fallthru
      _
    // Predicated region
    $region30: #{tpu_custom_call.1} parent=1 // pred_check
      _
    $region31: #{tpu_custom_call.1} parent=1 // pred_check_branch
      %132 = sbr.rel (0) target = $region33
    $region32: #{tpu_custom_call.1} parent=1 // pred_region
      %134 = dma.done [#allocation5], 128
    $region33: #{tpu_custom_call.1} parent=1 // pred_fallthru
      _
    %135 = vsyncpa [#allocation4], 1
    %136 = vsyncpa [#allocation7], 1
    %137 = vsyncpa [#allocation5], 1

</llo_original>
